<compile_context>
chip_gen: v7x
topology: tpu7x:2x2x1
jax: 0.10.0
libtpu: 0.0.40
codegen_flags: <defaults>
</compile_context>

<pallas_src>
import jax
import jax.numpy as jnp
from jax import lax
from jax.experimental import pallas as pl
from jax.experimental.pallas import tpu as pltpu


def _cdiv(a, b):
    return -(-a // b)


def _round_up(a, b):
    return _cdiv(a, b) * b


def _pick_tile(n, block_n):
    """Row-tile size: multiple of 8, <= block_n, even grid-step count if possible."""
    t = min(_round_up(n, 8), _round_up(block_n, 8))
    steps = _cdiv(n, t)
    if steps > 1 and steps % 2 == 1:
        t2 = _round_up(_cdiv(n, steps + 1), 8)
        if _cdiv(n, t2) % 2 == 0:
            t = t2
    return t


def _cosine_sim_kernel(x_ref, w_ref, b_ref, o_ref):
    # x_ref: (T, H*D)      sample tile, feature axis lane-dense (consumed as bf16)
    # w_ref: (H*D, 2*C*D)  expanded conv weight, bf16, column = half*CD + d*C + c
    # b_ref: (1, 2*C*D)    bias row, f32
    # o_ref: (T, C)        f32 output
    C = o_ref.shape[1]
    cd2 = w_ref.shape[1]
    cd = cd2 // 2
    nfold = cd // 128

    # Both conv halves in ONE single-pass bf16 MXU matmul, f32 accumulation.
    x = x_ref[...].astype(jnp.bfloat16)                        # no-op for bf16 input
    p = jnp.dot(x, w_ref[...], preferred_element_type=jnp.float32) + b_ref[...]
    p1 = p[:, :cd]                                             # (T, C*D), lane = d*C + c
    p2 = p[:, cd:]                                             # vreg-aligned slices (free)

    # Stage-1 reduce over d: fold 128-lane chunks with plain VPU adds
    # (d-major columns => every chunk shares the same c pattern).
    def fold(q):
        acc = q[:, :128]
        for j in range(1, nfold):
            acc = acc + q[:, j * 128:(j + 1) * 128]
        return acc.astype(jnp.bfloat16)

    # Stage-2 reduce: tiny (T,128)x(128,C) bf16 dot; 0/1 matrix R[l,c] = (l % C == c)
    # is synthesized on-chip (no extra DMA stream).
    lane = lax.broadcasted_iota(jnp.int32, (128, C), 0)
    col = lax.broadcasted_iota(jnp.int32, (128, C), 1)
    red = jnp.where(lane % C == col, 1.0, 0.0).astype(jnp.bfloat16)

    def reduce_c(q):
        return jnp.dot(fold(q), red, preferred_element_type=jnp.float32)

    num = reduce_c(p1 * p2)                                    # (T, C)
    n1sq = reduce_c(p1 * p1)
    n2sq = reduce_c(p2 * p2)

    # denom = sqrt(max(n1sq, eps^2) * max(n2sq, eps^2)); rsqrt runs on the EUP.
    eps2 = jnp.float32(1e-16)
    denom = jnp.maximum(n1sq, eps2) * jnp.maximum(n2sq, eps2)
    o_ref[...] = num * lax.rsqrt(denom)


def prepare_cosine_sim_params(w, b, feat_dim):
    """Build kernel constants once per weight update.

    w: (C, Hh) Conv2d(1, C, (Hh, 1)) weight (squeezed), b: (C,), feat_dim: D.
    Returns (w_exp bf16 (H*D, 2*C*D) with d-major columns, bias_row f32 (1, 2*C*D)).
    """
    C, Hh = w.shape
    D = feat_dim
    CD = C * D
    f32 = jnp.float32
    w = w.astype(f32)
    b = b.astype(f32)
    # Half block: blk[h*D + d, e*C + c] = w[c, h] * (d == e)
    blk = jnp.einsum('ch,de->hdec', w, jnp.eye(D, dtype=f32)).reshape(Hh * D, CD)
    zero = jnp.zeros_like(blk)
    w_exp = jnp.concatenate(
        [jnp.concatenate([blk, zero], axis=1),
         jnp.concatenate([zero, blk], axis=1)], axis=0).astype(jnp.bfloat16)   # (H*D, 2CD)
    bias_row = jnp.tile(b, 2 * D)[None, :]                                     # (1, 2CD) f32
    return w_exp, bias_row


def cosine_similarity_forward(x, w_exp, bias_row, *, block_n=1024):
    """x: (B, S, H, D) f32 or bf16 -> (B*S, C) f32.

    block_n: row-tile size. 1024 is v7x-safe; v5e/v6e can use 2048.
    """
    B, S, H, D = x.shape
    N = B * S
    HD = H * D
    CD2 = w_exp.shape[1]
    CD = CD2 // 2
    C = CD // D
    assert w_exp.shape[0] == HD
    # TODO(synk): generic C would need the (CD, C) MXU seg-reduce fallback.
    assert CD % 128 == 0 and 128 % C == 0, "kernel assumes C | 128 and 128 | C*D"
    assert block_n >= 8

    x2 = x.reshape(N, HD)                 # contiguous minor-dim merge: free, no HBM pass
    T = _pick_tile(N, block_n)
    grid = _cdiv(N, T)                    # ragged tail handled by Pallas edge masking (no jnp.pad)

    return pl.pallas_call(
        _cosine_sim_kernel,
        out_shape=jax.ShapeDtypeStruct((N, C), jnp.float32),
        grid_spec=pltpu.PrefetchScalarGridSpec(
            num_scalar_prefetch=0,
            grid=(grid,),
            in_specs=[
                pl.BlockSpec((T, HD), lambda i: (i, 0)),       # streamed sample tile
                pl.BlockSpec((HD, CD2), lambda i: (0, 0)),     # constants: fetched once
                pl.BlockSpec((1, CD2), lambda i: (0, 0)),
            ],
            out_specs=pl.BlockSpec((T, C), lambda i: (i, 0)),  # (N, C) written directly
        ),
        compiler_params=pltpu.CompilerParams(
            dimension_semantics=("parallel",),                 # megacore-shardable
            vmem_limit_bytes=48 * 1024 * 1024,
        ),
    )(x2, w_exp, bias_row)


def cosine_similarity(x, w, b, *, block_n=1024):
    """Convenience wrapper (constants rebuilt per call; prefer hoisting)."""
    w_exp, bias_row = prepare_cosine_sim_params(w, b, x.shape[3])
    return cosine_similarity_forward(x, w_exp, bias_row, block_n=block_n)


def _reference(x, w, b):
    B, S, H, D = x.shape
    Hh = w.shape[1]
    hp = lax.Precision.HIGHEST
    xr = x.reshape(B * S, H, D).astype(jnp.float32)
    w = w.astype(jnp.float32)
    b = b.astype(jnp.float32)
    p1 = jnp.einsum('ch,nhd->ncd', w, xr[:, :Hh], precision=hp) + b[None, :, None]
    p2 = jnp.einsum('ch,nhd->ncd', w, xr[:, Hh:], precision=hp) + b[None, :, None]
    num = jnp.sum(p1 * p2, axis=2)
    n1 = jnp.maximum(jnp.sqrt(jnp.sum(p1 * p1, axis=2)), 1e-8)
    n2 = jnp.maximum(jnp.sqrt(jnp.sum(p2 * p2, axis=2)), 1e-8)
    return num / (n1 * n2)


if __name__ == "__main__":
    # cfg: shot_num=8, sim_channel=32; per-shot feature dim D=16
    shot_num, D, C = 8, 16, 32
    Hh = shot_num // 2

    key = jax.random.PRNGKey(0)
    kx, kw, kb, kx2 = jax.random.split(key, 4)

    # Conv2d weight in torch is (C, 1, Hh, 1); only (C, Hh) carries information.
    w = jax.random.normal(kw, (C, Hh), dtype=jnp.float32) * 0.1
    b = jax.random.normal(kb, (C,), dtype=jnp.float32) * 0.1

    # Constants hoisted: built once, reused across all forward calls.
    w_exp, bias_row = prepare_cosine_sim_params(w, b, D)

    # Small shape: single grid step.
    B, S = 2, 4
    x = jax.random.normal(kx, (B, S, shot_num, D), dtype=jnp.float32)
    out = jax.block_until_ready(cosine_similarity_forward(x, w_exp, bias_row))
    ref = _reference(x, w, b)
    assert out.shape == (B * S, C)
    err = float(jnp.max(jnp.abs(out - ref)))
    assert err < 3e-2, f"small-shape max abs err {err}"

    # Larger shape: multi-step grid (T=1024, 2 steps) with a masked ragged tail.
    B2, S2 = 2, 600
    x_big = jax.random.normal(kx2, (B2, S2, shot_num, D), dtype=jnp.float32)
    out_big = jax.block_until_ready(cosine_similarity_forward(x_big, w_exp, bias_row))
    ref_big = _reference(x_big, w, b)
    assert out_big.shape == (B2 * S2, C)
    err_big = float(jnp.max(jnp.abs(out_big - ref_big)))
    assert err_big < 3e-2, f"big-shape max abs err {err_big}"

    # Native bf16 input path (halves HBM read traffic; no in-kernel upcast).
    out_bf16 = jax.block_until_ready(
        cosine_similarity_forward(x_big.astype(jnp.bfloat16), w_exp, bias_row))
    err_bf16 = float(jnp.max(jnp.abs(out_bf16 - ref_big)))
    assert err_bf16 < 5e-2, f"bf16-input max abs err {err_bf16}"

    print("KERNEL_OK")
</pallas_src>

<mosaic_0001>
module attributes {stable_mosaic.version = 11 : i64} {
  func.func @_cosine_sim_kernel(%arg0: i32, %arg1: memref<8x128xf32, #tpu.memory_space<vmem>>, %arg2: memref<128x1024xbf16, #tpu.memory_space<vmem>>, %arg3: memref<1x1024xf32, #tpu.memory_space<vmem>>, %arg4: memref<8x32xf32, #tpu.memory_space<vmem>>) attributes {dimension_semantics = [#tpu.dimension_semantics<parallel>], iteration_bounds = array<i64: 1>, scalar_prefetch = 0 : i64, scratch_operands = 0 : i64, tpu.core_type = #tpu.core_type<tc>, window_params = [{transform_indices = @transform_0, window_bounds = array<i64: 8, 128>}, {pipeline_mode = #tpu.pipeline_mode<synchronous>, transform_indices = @transform_1, window_bounds = array<i64: 128, 1024>}, {pipeline_mode = #tpu.pipeline_mode<synchronous>, transform_indices = @transform_2, window_bounds = array<i64: 1, 1024>}, {transform_indices = @transform_3, window_bounds = array<i64: 8, 32>}]} {
    %c0 = arith.constant 0 : index
    %c0_0 = arith.constant 0 : index
    %0 = vector.load %arg1[%c0, %c0_0] : memref<8x128xf32, #tpu.memory_space<vmem>>, vector<8x128xf32>
    %1 = arith.truncf %0 : vector<8x128xf32> to vector<8x128xbf16>
    %c0_1 = arith.constant 0 : index
    %c0_2 = arith.constant 0 : index
    %2 = vector.load %arg2[%c0_1, %c0_2] : memref<128x1024xbf16, #tpu.memory_space<vmem>>, vector<128x1024xbf16>
    %cst = arith.constant dense<0.000000e+00> : vector<8x1024xf32>
    %3 = tpu.matmul %1, %2, %cst {dimension_numbers = #tpu.dot_dimension_numbers<[1], [0], [0], [1], [0, 0, 1, 1], [], []>} : vector<8x128xbf16>, vector<128x1024xbf16>, vector<8x1024xf32> -> vector<8x1024xf32>
    %c0_3 = arith.constant 0 : index
    %c0_4 = arith.constant 0 : index
    %4 = vector.load %arg3[%c0_3, %c0_4] : memref<1x1024xf32, #tpu.memory_space<vmem>>, vector<1x1024xf32>
    %5 = vector.broadcast %4 : vector<1x1024xf32> to vector<8x1024xf32>
    %6 = arith.addf %3, %5 : vector<8x1024xf32>
    %7 = vector.extract_strided_slice %6 {offsets = [0, 0], sizes = [8, 512], strides = [1, 1]} : vector<8x1024xf32> to vector<8x512xf32>
    %8 = vector.extract_strided_slice %6 {offsets = [0, 512], sizes = [8, 512], strides = [1, 1]} : vector<8x1024xf32> to vector<8x512xf32>
    %9 = tpu.iota {dimensions = array<i32: 0>} : vector<128x32xi32>
    %10 = tpu.iota {dimensions = array<i32: 1>} : vector<128x32xi32>
    %c32_i32 = arith.constant 32 : i32
    %c0_i32 = arith.constant 0 : i32
    %11 = arith.cmpi eq, %c32_i32, %c0_i32 : i32
    %c1_i32 = arith.constant 1 : i32
    %12 = arith.select %11, %c1_i32, %c32_i32 : i32
    %13 = vector.broadcast %12 : i32 to vector<128x32xi32>
    %14 = arith.remsi %9, %13 : vector<128x32xi32>
    %c0_i32_5 = arith.constant 0 : i32
    %15 = vector.broadcast %c0_i32_5 : i32 to vector<128x32xi32>
    %16 = arith.cmpi ne, %14, %15 : vector<128x32xi32>
    %c0_i32_6 = arith.constant 0 : i32
    %17 = vector.broadcast %c0_i32_6 : i32 to vector<128x32xi32>
    %18 = arith.cmpi slt, %14, %17 : vector<128x32xi32>
    %c0_i32_7 = arith.constant 0 : i32
    %19 = arith.cmpi slt, %12, %c0_i32_7 : i32
    %20 = vector.broadcast %19 : i1 to vector<128x32xi1>
    %21 = vector.broadcast %20 : vector<128x32xi1> to vector<128x32xi1>
    %22 = arith.xori %18, %21 : vector<128x32xi1>
    %23 = arith.andi %22, %16 : vector<128x32xi1>
    %24 = vector.broadcast %12 : i32 to vector<128x32xi32>
    %25 = arith.addi %14, %24 : vector<128x32xi32>
    %26 = arith.select %23, %25, %14 : vector<128x32xi1>, vector<128x32xi32>
    %27 = arith.cmpi eq, %26, %10 : vector<128x32xi32>
    %cst_8 = arith.constant 1.000000e+00 : f32
    %cst_9 = arith.constant 0.000000e+00 : f32
    %28 = vector.broadcast %cst_8 : f32 to vector<128x32xf32>
    %29 = vector.broadcast %cst_9 : f32 to vector<128x32xf32>
    %30 = arith.select %27, %28, %29 : vector<128x32xi1>, vector<128x32xf32>
    %31 = arith.truncf %30 : vector<128x32xf32> to vector<128x32xbf16>
    %32 = arith.mulf %7, %8 : vector<8x512xf32>
    %33 = vector.extract_strided_slice %32 {offsets = [0, 0], sizes = [8, 128], strides = [1, 1]} : vector<8x512xf32> to vector<8x128xf32>
    %34 = vector.extract_strided_slice %32 {offsets = [0, 128], sizes = [8, 128], strides = [1, 1]} : vector<8x512xf32> to vector<8x128xf32>
    %35 = arith.addf %33, %34 : vector<8x128xf32>
    %36 = vector.extract_strided_slice %32 {offsets = [0, 256], sizes = [8, 128], strides = [1, 1]} : vector<8x512xf32> to vector<8x128xf32>
    %37 = arith.addf %35, %36 : vector<8x128xf32>
    %38 = vector.extract_strided_slice %32 {offsets = [0, 384], sizes = [8, 128], strides = [1, 1]} : vector<8x512xf32> to vector<8x128xf32>
    %39 = arith.addf %37, %38 : vector<8x128xf32>
    %40 = arith.truncf %39 : vector<8x128xf32> to vector<8x128xbf16>
    %cst_10 = arith.constant dense<0.000000e+00> : vector<8x32xf32>
    %41 = tpu.matmul %40, %31, %cst_10 {dimension_numbers = #tpu.dot_dimension_numbers<[1], [0], [0], [1], [0, 0, 1, 1], [], []>} : vector<8x128xbf16>, vector<128x32xbf16>, vector<8x32xf32> -> vector<8x32xf32>
    %42 = arith.mulf %7, %7 : vector<8x512xf32>
    %43 = vector.extract_strided_slice %42 {offsets = [0, 0], sizes = [8, 128], strides = [1, 1]} : vector<8x512xf32> to vector<8x128xf32>
    %44 = vector.extract_strided_slice %42 {offsets = [0, 128], sizes = [8, 128], strides = [1, 1]} : vector<8x512xf32> to vector<8x128xf32>
    %45 = arith.addf %43, %44 : vector<8x128xf32>
    %46 = vector.extract_strided_slice %42 {offsets = [0, 256], sizes = [8, 128], strides = [1, 1]} : vector<8x512xf32> to vector<8x128xf32>
    %47 = arith.addf %45, %46 : vector<8x128xf32>
    %48 = vector.extract_strided_slice %42 {offsets = [0, 384], sizes = [8, 128], strides = [1, 1]} : vector<8x512xf32> to vector<8x128xf32>
    %49 = arith.addf %47, %48 : vector<8x128xf32>
    %50 = arith.truncf %49 : vector<8x128xf32> to vector<8x128xbf16>
    %cst_11 = arith.constant dense<0.000000e+00> : vector<8x32xf32>
    %51 = tpu.matmul %50, %31, %cst_11 {dimension_numbers = #tpu.dot_dimension_numbers<[1], [0], [0], [1], [0, 0, 1, 1], [], []>} : vector<8x128xbf16>, vector<128x32xbf16>, vector<8x32xf32> -> vector<8x32xf32>
    %52 = arith.mulf %8, %8 : vector<8x512xf32>
    %53 = vector.extract_strided_slice %52 {offsets = [0, 0], sizes = [8, 128], strides = [1, 1]} : vector<8x512xf32> to vector<8x128xf32>
    %54 = vector.extract_strided_slice %52 {offsets = [0, 128], sizes = [8, 128], strides = [1, 1]} : vector<8x512xf32> to vector<8x128xf32>
    %55 = arith.addf %53, %54 : vector<8x128xf32>
    %56 = vector.extract_strided_slice %52 {offsets = [0, 256], sizes = [8, 128], strides = [1, 1]} : vector<8x512xf32> to vector<8x128xf32>
    %57 = arith.addf %55, %56 : vector<8x128xf32>
    %58 = vector.extract_strided_slice %52 {offsets = [0, 384], sizes = [8, 128], strides = [1, 1]} : vector<8x512xf32> to vector<8x128xf32>
    %59 = arith.addf %57, %58 : vector<8x128xf32>
    %60 = arith.truncf %59 : vector<8x128xf32> to vector<8x128xbf16>
    %cst_12 = arith.constant dense<0.000000e+00> : vector<8x32xf32>
    %61 = tpu.matmul %60, %31, %cst_12 {dimension_numbers = #tpu.dot_dimension_numbers<[1], [0], [0], [1], [0, 0, 1, 1], [], []>} : vector<8x128xbf16>, vector<128x32xbf16>, vector<8x32xf32> -> vector<8x32xf32>
    %cst_13 = arith.constant 1.000000e-16 : f32
    %62 = vector.broadcast %cst_13 : f32 to vector<8x32xf32>
    %63 = arith.maximumf %51, %62 : vector<8x32xf32>
    %cst_14 = arith.constant 1.000000e-16 : f32
    %64 = vector.broadcast %cst_14 : f32 to vector<8x32xf32>
    %65 = arith.maximumf %61, %64 : vector<8x32xf32>
    %66 = arith.mulf %63, %65 : vector<8x32xf32>
    %67 = math.rsqrt %66 : vector<8x32xf32>
    %68 = arith.mulf %41, %67 : vector<8x32xf32>
    %c0_15 = arith.constant 0 : index
    %c0_16 = arith.constant 0 : index
    %69 = vector.load %arg4[%c0_15, %c0_16] : memref<8x32xf32, #tpu.memory_space<vmem>>, vector<8x32xf32>
    tpu.vector_store %arg4[%c0_15, %c0_16], %68 {strides = array<i32>} : memref<8x32xf32, #tpu.memory_space<vmem>>, vector<8x32xf32>,
    return
  }
  func.func @transform_0(%arg0: i32) -> (i32, i32) {
    %c0_i32 = arith.constant 0 : i32
    %c0_i32_0 = arith.constant 0 : i32
    return %arg0, %c0_i32 : i32, i32
  }
  func.func @transform_1(%arg0: i32) -> (i32, i32) {
    %c0_i32 = arith.constant 0 : i32
    %c0_i32_0 = arith.constant 0 : i32
    %c0_i32_1 = arith.constant 0 : i32
    return %c0_i32, %c0_i32_0 : i32, i32
  }
  func.func @transform_2(%arg0: i32) -> (i32, i32) {
    %c0_i32 = arith.constant 0 : i32
    %c0_i32_0 = arith.constant 0 : i32
    %c0_i32_1 = arith.constant 0 : i32
    return %c0_i32, %c0_i32_0 : i32, i32
  }
  func.func @transform_3(%arg0: i32) -> (i32, i32) {
    %c0_i32 = arith.constant 0 : i32
    %c0_i32_0 = arith.constant 0 : i32
    return %arg0, %c0_i32 : i32, i32
  }
}

</mosaic_0001>

<llo_original>
// kernel: tpu_custom_call.1
$region0: #{tpu_custom_call.1}
  #allocation0 [shape = 'u32[]', space=smem, size = 0x4, offset = 0x4, fixed_abs, tag = 'smem constant byte address 0x4 - core index']
  #allocation1 [shape = 'u32[144,128]{1,0:T(1,128)}', space=vmem, size = 0x12000, scoped, tag = 'internal scratch']
  %s0 = inlined_call_operand.hbm [shape: f32[8,128], index: 0, kind: input, shape index: {}]
  %s1 = inlined_call_operand.hbm [shape: bf16[128,1024], index: 1, kind: input, shape index: {}]
  %s2 = inlined_call_operand.hbm [shape: f32[1,1024], index: 2, kind: input, shape index: {}]
  %s3 = inlined_call_operand.hbm [shape: f32[8,32], index: 3, kind: output, shape index: {}]
  %s4 = sld [smem:[#allocation0]]
  $region34: #{tpu_custom_call.1} parent=0
    _
  %s6 = ssub.s32 1, %s4
  %s7 = scalar_select 0, %s6, %s4
  $region1: #{tpu_custom_call.1} parent=0
    #allocation2 [shape = 'u8[4096]{0}', space=vmem, size = 0x1000, scoped, tag = 'input window, operand 0, single buffered']
    #allocation3 [shape = 's32[1]{0}', space=sflag, size = 0x4, scoped, tag = 'scoped memory for tpu_custom_call.1']
    #allocation4 [shape = 's32[1]{0}', space=sflag, size = 0x4, scoped, tag = 'scoped memory for tpu_custom_call.1']
    #allocation5 [shape = 'u8[262144]{0}', space=vmem, size = 0x40000, scoped, tag = 'input window, operand 1, single buffered']
    #allocation6 [shape = 's32[1]{0}', space=sflag, size = 0x4, scoped, tag = 'scoped memory for tpu_custom_call.1']
    #allocation7 [shape = 'u8[4096]{0}', space=vmem, size = 0x1000, scoped, tag = 'input window, operand 2, single buffered']
    #allocation8 [shape = 'u8[4096]{0}', space=vmem, size = 0x1000, scoped, tag = 'output window, operand 0, single buffered']
    %8 = vsyncpa [#allocation3], 0
    %9 = vsyncpa [#allocation6], 0
    %10 = vsyncpa [#allocation4], 0
    // Predicated region
    $region2: #{tpu_custom_call.1} parent=1 // pred_check
      _
    $region3: #{tpu_custom_call.1} parent=1 // pred_check_branch
      %12 = sbr.rel (0) target = $region5
    $region4: #{tpu_custom_call.1} parent=1 // pred_region
      %s14 = ssub.s32 128, 128
      %15 = vsyncadd [#allocation3], %s14
      %s17 = sshll.u32 [#allocation2], 4
      %s18 = int_to_ptr.vmem [resolvable:$true] %s17
      %20 = dma.hbm_to_vmem [thread:$0]  %s0, 128, %s18, [#allocation3]
    $region5: #{tpu_custom_call.1} parent=1 // pred_fallthru
      _
    // Predicated region
    $region6: #{tpu_custom_call.1} parent=1 // pred_check
      _
    $region7: #{tpu_custom_call.1} parent=1 // pred_check_branch
      %22 = sbr.rel (0) target = $region9
    $region8: #{tpu_custom_call.1} parent=1 // pred_region
      %s24 = ssub.s32 8192, 8192
      %25 = vsyncadd [#allocation6], %s24
      %s26 = sshll.u32 [#allocation5], 4
      %s27 = int_to_ptr.vmem [resolvable:$true] %s26
      %32 = dma.hbm_to_vmem [thread:$0]  %s1, 8192, %s27, [#allocation6], 512, 512, 32
    $region9: #{tpu_custom_call.1} parent=1 // pred_fallthru
      _
    // Predicated region
    $region10: #{tpu_custom_call.1} parent=1 // pred_check
      _
    $region11: #{tpu_custom_call.1} parent=1 // pred_check_branch
      %34 = sbr.rel (0) target = $region13
    $region12: #{tpu_custom_call.1} parent=1 // pred_region
      %s36 = ssub.s32 128, 128
      %37 = vsyncadd [#allocation6], %s36
      %s39 = sshll.u32 [#allocation7], 4
      %s40 = int_to_ptr.vmem [resolvable:$true] %s39
      %42 = dma.hbm_to_vmem [thread:$0]  %s2, 128, %s40, [#allocation6]
    $region13: #{tpu_custom_call.1} parent=1 // pred_fallthru
      _
    // Predicated region
    $region14: #{tpu_custom_call.1} parent=1 // pred_check
      _
    $region15: #{tpu_custom_call.1} parent=1 // pred_check_branch
      %44 = sbr.rel (0) target = $region17
    $region16: #{tpu_custom_call.1} parent=1 // pred_region
      %45 = dma.done [#allocation3], 128
    $region17: #{tpu_custom_call.1} parent=1 // pred_fallthru
      _
    // Predicated region
    $region18: #{tpu_custom_call.1} parent=1 // pred_check
      _
    $region19: #{tpu_custom_call.1} parent=1 // pred_check_branch
      %47 = sbr.rel (0) target = $region21
    $region20: #{tpu_custom_call.1} parent=1 // pred_region
      %48 = dma.done [#allocation6], 8192
    $region21: #{tpu_custom_call.1} parent=1 // pred_fallthru
      _
    // Predicated region
    $region22: #{tpu_custom_call.1} parent=1 // pred_check
      _
    $region23: #{tpu_custom_call.1} parent=1 // pred_check_branch
      %50 = sbr.rel (0) target = $region25
    $region24: #{tpu_custom_call.1} parent=1 // pred_region
      %51 = dma.done [#allocation6], 128
    $region25: #{tpu_custom_call.1} parent=1 // pred_fallthru
      _
    %v53 = vld [vmem:[#allocation2] sm:$0xff]
    %v54 = vpack.c.bf16 %v53, %v53
    %v55 = vld [vmem:[#allocation5] sm:$0xff]
    %v56 = vld [vmem:[#allocation5 + $0x8] sm:$0xff]
    %v57 = vld [vmem:[#allocation5 + $0x10] sm:$0xff]
    %v58 = vld [vmem:[#allocation5 + $0x18] sm:$0xff]
    %v59 = vld [vmem:[#allocation5 + $0x20] sm:$0xff]
    %v60 = vld [vmem:[#allocation5 + $0x28] sm:$0xff]
    %v61 = vld [vmem:[#allocation5 + $0x30] sm:$0xff]
    %v62 = vld [vmem:[#allocation5 + $0x38] sm:$0xff]
    %v63 = vld [vmem:[#allocation5 + $0x40] sm:$0xff]
    %v64 = vld [vmem:[#allocation5 + $0x48] sm:$0xff]
    %v65 = vld [vmem:[#allocation5 + $0x50] sm:$0xff]
    %v66 = vld [vmem:[#allocation5 + $0x58] sm:$0xff]
    %v67 = vld [vmem:[#allocation5 + $0x60] sm:$0xff]
    %v68 = vld [vmem:[#allocation5 + $0x68] sm:$0xff]
    %v69 = vld [vmem:[#allocation5 + $0x70] sm:$0xff]
    %v70 = vld [vmem:[#allocation5 + $0x78] sm:$0xff]
    %v71 = vld [vmem:[#allocation5 + $0x80] sm:$0xff]
    %v72 = vld [vmem:[#allocation5 + $0x88] sm:$0xff]
    %v73 = vld [vmem:[#allocation5 + $0x90] sm:$0xff]
    %v74 = vld [vmem:[#allocation5 + $0x98] sm:$0xff]
    %v75 = vld [vmem:[#allocation5 + $0xa0] sm:$0xff]
    %v76 = vld [vmem:[#allocation5 + $0xa8] sm:$0xff]
    %v77 = vld [vmem:[#allocation5 + $0xb0] sm:$0xff]
    %v78 = vld [vmem:[#allocation5 + $0xb8] sm:$0xff]
    %v79 = vld [vmem:[#allocation5 + $0xc0] sm:$0xff]
    %v80 = vld [vmem:[#allocation5 + $0xc8] sm:$0xff]
    %v81 = vld [vmem:[#allocation5 + $0xd0] sm:$0xff]
    %v82 = vld [vmem:[#allocation5 + $0xd8] sm:$0xff]
    %v83 = vld [vmem:[#allocation5 + $0xe0] sm:$0xff]
    %v84 = vld [vmem:[#allocation5 + $0xe8] sm:$0xff]
    %v85 = vld [vmem:[#allocation5 + $0xf0] sm:$0xff]
    %v86 = vld [vmem:[#allocation5 + $0xf8] sm:$0xff]
    %v87 = vld [vmem:[#allocation5 + $0x100] sm:$0xff]
    %v88 = vld [vmem:[#allocation5 + $0x108] sm:$0xff]
    %v89 = vld [vmem:[#allocation5 + $0x110] sm:$0xff]
    %v90 = vld [vmem:[#allocation5 + $0x118] sm:$0xff]
    %v91 = vld [vmem:[#allocation5 + $0x120] sm:$0xff]
    %v92 = vld [vmem:[#allocation5 + $0x128] sm:$0xff]
    %v93 = vld [vmem:[#allocation5 + $0x130] sm:$0xff]
    %v94 = vld [vmem:[#allocation5 + $0x138] sm:$0xff]
    %v95 = vld [vmem:[#allocation5 + $0x140] sm:$0xff]
    %v96 = vld [vmem:[#allocation5 + $0x148] sm:$0xff]
    %v97 = vld [vmem:[#allocation5 + $0x150] sm:$0xff]
    %v98 = vld [vmem:[#allocation5 + $0x158] sm:$0xff]
    %v99 = vld [vmem:[#allocation5 + $0x160] sm:$0xff]
    %v100 = vld [vmem:[#allocation5 + $0x168] sm:$0xff]
    %v101 = vld [vmem:[#allocation5 + $0x170] sm:$0xff]
    %v102 = vld [vmem:[#allocation5 + $0x178] sm:$0xff]
    %v103 = vld [vmem:[#allocation5 + $0x180] sm:$0xff]
    %v104 = vld [vmem:[#allocation5 + $0x188] sm:$0xff]
    %v105 = vld [vmem:[#allocation5 + $0x190] sm:$0xff]
    %v106 = vld [vmem:[#allocation5 + $0x198] sm:$0xff]
    %v107 = vld [vmem:[#allocation5 + $0x1a0] sm:$0xff]
    %v108 = vld [vmem:[#allocation5 + $0x1a8] sm:$0xff]
    %v109 = vld [vmem:[#allocation5 + $0x1b0] sm:$0xff]
    %v110 = vld [vmem:[#allocation5 + $0x1b8] sm:$0xff]
    %v111 = vld [vmem:[#allocation5 + $0x1c0] sm:$0xff]
    %v112 = vld [vmem:[#allocation5 + $0x1c8] sm:$0xff]
    %v113 = vld [vmem:[#allocation5 + $0x1d0] sm:$0xff]
    %v114 = vld [vmem:[#allocation5 + $0x1d8] sm:$0xff]
    %v115 = vld [vmem:[#allocation5 + $0x1e0] sm:$0xff]
    %v116 = vld [vmem:[#allocation5 + $0x1e8] sm:$0xff]
    %v117 = vld [vmem:[#allocation5 + $0x1f0] sm:$0xff]
    %v118 = vld [vmem:[#allocation5 + $0x1f8] sm:$0xff]
    %v119 = vld [vmem:[#allocation7] sm:$0xff]
    %v121 = vlaneseq
    %v122 = vshrl.u32 %v121, 7
    %v123 = vsub.s32 0, %v122
    %v124 = vrot.slane %v119, %v123
    %v125 = vlaneseq
    %v126 = vshrl.u32 %v125, 7
    %v127 = vsub.s32 1, %v126
    %v128 = vrot.slane %v119, %v127
    %v129 = vlaneseq
    %v130 = vshrl.u32 %v129, 7
    %v131 = vsub.s32 2, %v130
    %v132 = vrot.slane %v119, %v131
    %v133 = vlaneseq
    %v134 = vshrl.u32 %v133, 7
    %v135 = vsub.s32 3, %v134
    %v136 = vrot.slane %v119, %v135
    %v137 = vlaneseq
    %v138 = vshrl.u32 %v137, 7
    %v139 = vsub.s32 4, %v138
    %v140 = vrot.slane %v119, %v139
    %v141 = vlaneseq
    %v142 = vshrl.u32 %v141, 7
    %v143 = vsub.s32 5, %v142
    %v144 = vrot.slane %v119, %v143
    %v145 = vlaneseq
    %v146 = vshrl.u32 %v145, 7
    %v147 = vsub.s32 6, %v146
    %v148 = vrot.slane %v119, %v147
    %v149 = vlaneseq
    %v150 = vshrl.u32 %v149, 7
    %v151 = vsub.s32 7, %v150
    %v152 = vrot.slane %v119, %v151
    %v225 = vunpack.c.l.b16 %v55
    %v226 = vunpack.c.h.b16 %v55
    %v227 = vunpack.c.l.b16 %v56
    %v228 = vunpack.c.h.b16 %v56
    %v229 = vunpack.c.l.b16 %v57
    %v230 = vunpack.c.h.b16 %v57
    %v231 = vunpack.c.l.b16 %v58
    %v232 = vunpack.c.h.b16 %v58
    %v233 = vunpack.c.l.b16 %v59
    %v234 = vunpack.c.h.b16 %v59
    %v235 = vunpack.c.l.b16 %v60
    %v236 = vunpack.c.h.b16 %v60
    %v237 = vunpack.c.l.b16 %v61
    %v238 = vunpack.c.h.b16 %v61
    %v239 = vunpack.c.l.b16 %v62
    %v240 = vunpack.c.h.b16 %v62
    %v241 = vunpack.c.l.b16 %v63
    %v242 = vunpack.c.h.b16 %v63
    %v243 = vunpack.c.l.b16 %v64
    %v244 = vunpack.c.h.b16 %v64
    %v245 = vunpack.c.l.b16 %v65
    %v246 = vunpack.c.h.b16 %v65
    %v247 = vunpack.c.l.b16 %v66
    %v248 = vunpack.c.h.b16 %v66
    %v249 = vunpack.c.l.b16 %v67
    %v250 = vunpack.c.h.b16 %v67
    %v251 = vunpack.c.l.b16 %v68
    %v252 = vunpack.c.h.b16 %v68
    %v253 = vunpack.c.l.b16 %v69
    %v254 = vunpack.c.h.b16 %v69
    %v255 = vunpack.c.l.b16 %v70
    %v256 = vunpack.c.h.b16 %v70
    %v257 = vunpack.c.l.b16 %v71
    %v258 = vunpack.c.h.b16 %v71
    %v259 = vunpack.c.l.b16 %v72
    %v260 = vunpack.c.h.b16 %v72
    %v261 = vunpack.c.l.b16 %v73
    %v262 = vunpack.c.h.b16 %v73
    %v263 = vunpack.c.l.b16 %v74
    %v264 = vunpack.c.h.b16 %v74
    %v265 = vunpack.c.l.b16 %v75
    %v266 = vunpack.c.h.b16 %v75
    %v267 = vunpack.c.l.b16 %v76
    %v268 = vunpack.c.h.b16 %v76
    %v269 = vunpack.c.l.b16 %v77
    %v270 = vunpack.c.h.b16 %v77
    %v271 = vunpack.c.l.b16 %v78
    %v272 = vunpack.c.h.b16 %v78
    %v273 = vunpack.c.l.b16 %v79
    %v274 = vunpack.c.h.b16 %v79
    %v275 = vunpack.c.l.b16 %v80
    %v276 = vunpack.c.h.b16 %v80
    %v277 = vunpack.c.l.b16 %v81
    %v278 = vunpack.c.h.b16 %v81
    %v279 = vunpack.c.l.b16 %v82
    %v280 = vunpack.c.h.b16 %v82
    %v281 = vunpack.c.l.b16 %v83
    %v282 = vunpack.c.h.b16 %v83
    %v283 = vunpack.c.l.b16 %v84
    %v284 = vunpack.c.h.b16 %v84
    %v285 = vunpack.c.l.b16 %v85
    %v286 = vunpack.c.h.b16 %v85
    %v287 = vunpack.c.l.b16 %v86
    %v288 = vunpack.c.h.b16 %v86
    %v289 = vunpack.c.l.b16 %v87
    %v290 = vunpack.c.h.b16 %v87
    %v291 = vunpack.c.l.b16 %v88
    %v292 = vunpack.c.h.b16 %v88
    %v293 = vunpack.c.l.b16 %v89
    %v294 = vunpack.c.h.b16 %v89
    %v295 = vunpack.c.l.b16 %v90
    %v296 = vunpack.c.h.b16 %v90
    %v297 = vunpack.c.l.b16 %v91
    %v298 = vunpack.c.h.b16 %v91
    %v299 = vunpack.c.l.b16 %v92
    %v300 = vunpack.c.h.b16 %v92
    %v301 = vunpack.c.l.b16 %v93
    %v302 = vunpack.c.h.b16 %v93
    %v303 = vunpack.c.l.b16 %v94
    %v304 = vunpack.c.h.b16 %v94
    %v305 = vunpack.c.l.b16 %v95
    %v306 = vunpack.c.h.b16 %v95
    %v307 = vunpack.c.l.b16 %v96
    %v308 = vunpack.c.h.b16 %v96
    %v309 = vunpack.c.l.b16 %v97
    %v310 = vunpack.c.h.b16 %v97
    %v311 = vunpack.c.l.b16 %v98
    %v312 = vunpack.c.h.b16 %v98
    %v313 = vunpack.c.l.b16 %v99
    %v314 = vunpack.c.h.b16 %v99
    %v315 = vunpack.c.l.b16 %v100
    %v316 = vunpack.c.h.b16 %v100
    %v317 = vunpack.c.l.b16 %v101
    %v318 = vunpack.c.h.b16 %v101
    %v319 = vunpack.c.l.b16 %v102
    %v320 = vunpack.c.h.b16 %v102
    %v321 = vunpack.c.l.b16 %v103
    %v322 = vunpack.c.h.b16 %v103
    %v323 = vunpack.c.l.b16 %v104
    %v324 = vunpack.c.h.b16 %v104
    %v325 = vunpack.c.l.b16 %v105
    %v326 = vunpack.c.h.b16 %v105
    %v327 = vunpack.c.l.b16 %v106
    %v328 = vunpack.c.h.b16 %v106
    %v329 = vunpack.c.l.b16 %v107
    %v330 = vunpack.c.h.b16 %v107
    %v331 = vunpack.c.l.b16 %v108
    %v332 = vunpack.c.h.b16 %v108
    %v333 = vunpack.c.l.b16 %v109
    %v334 = vunpack.c.h.b16 %v109
    %v335 = vunpack.c.l.b16 %v110
    %v336 = vunpack.c.h.b16 %v110
    %v337 = vunpack.c.l.b16 %v111
    %v338 = vunpack.c.h.b16 %v111
    %v339 = vunpack.c.l.b16 %v112
    %v340 = vunpack.c.h.b16 %v112
    %v341 = vunpack.c.l.b16 %v113
    %v342 = vunpack.c.h.b16 %v113
    %v343 = vunpack.c.l.b16 %v114
    %v344 = vunpack.c.h.b16 %v114
    %v345 = vunpack.c.l.b16 %v115
    %v346 = vunpack.c.h.b16 %v115
    %v347 = vunpack.c.l.b16 %v116
    %v348 = vunpack.c.h.b16 %v116
    %v349 = vunpack.c.l.b16 %v117
    %v350 = vunpack.c.h.b16 %v117
    %v351 = vunpack.c.l.b16 %v118
    %v352 = vunpack.c.h.b16 %v118
    %v353 = vpack.c.b16 %v233, %v225
    %v354 = vpack.c.b16 %v234, %v226
    %v355 = vpack.c.b16 %v235, %v227
    %v356 = vpack.c.b16 %v236, %v228
    %v357 = vpack.c.b16 %v237, %v229
    %v358 = vpack.c.b16 %v238, %v230
    %v359 = vpack.c.b16 %v239, %v231
    %v360 = vpack.c.b16 %v240, %v232
    %v361 = vpack.c.b16 %v249, %v241
    %v362 = vpack.c.b16 %v250, %v242
    %v363 = vpack.c.b16 %v251, %v243
    %v364 = vpack.c.b16 %v252, %v244
    %v365 = vpack.c.b16 %v253, %v245
    %v366 = vpack.c.b16 %v254, %v246
    %v367 = vpack.c.b16 %v255, %v247
    %v368 = vpack.c.b16 %v256, %v248
    %v369 = vpack.c.b16 %v265, %v257
    %v370 = vpack.c.b16 %v266, %v258
    %v371 = vpack.c.b16 %v267, %v259
    %v372 = vpack.c.b16 %v268, %v260
    %v373 = vpack.c.b16 %v269, %v261
    %v374 = vpack.c.b16 %v270, %v262
    %v375 = vpack.c.b16 %v271, %v263
    %v376 = vpack.c.b16 %v272, %v264
    %v377 = vpack.c.b16 %v281, %v273
    %v378 = vpack.c.b16 %v282, %v274
    %v379 = vpack.c.b16 %v283, %v275
    %v380 = vpack.c.b16 %v284, %v276
    %v381 = vpack.c.b16 %v285, %v277
    %v382 = vpack.c.b16 %v286, %v278
    %v383 = vpack.c.b16 %v287, %v279
    %v384 = vpack.c.b16 %v288, %v280
    %v385 = vpack.c.b16 %v297, %v289
    %v386 = vpack.c.b16 %v298, %v290
    %v387 = vpack.c.b16 %v299, %v291
    %v388 = vpack.c.b16 %v300, %v292
    %v389 = vpack.c.b16 %v301, %v293
    %v390 = vpack.c.b16 %v302, %v294
    %v391 = vpack.c.b16 %v303, %v295
    %v392 = vpack.c.b16 %v304, %v296
    %v393 = vpack.c.b16 %v313, %v305
    %v394 = vpack.c.b16 %v314, %v306
    %v395 = vpack.c.b16 %v315, %v307
    %v396 = vpack.c.b16 %v316, %v308
    %v397 = vpack.c.b16 %v317, %v309
    %v398 = vpack.c.b16 %v318, %v310
    %v399 = vpack.c.b16 %v319, %v311
    %v400 = vpack.c.b16 %v320, %v312
    %v401 = vpack.c.b16 %v329, %v321
    %v402 = vpack.c.b16 %v330, %v322
    %v403 = vpack.c.b16 %v331, %v323
    %v404 = vpack.c.b16 %v332, %v324
    %v405 = vpack.c.b16 %v333, %v325
    %v406 = vpack.c.b16 %v334, %v326
    %v407 = vpack.c.b16 %v335, %v327
    %v408 = vpack.c.b16 %v336, %v328
    %v409 = vpack.c.b16 %v345, %v337
    %v410 = vpack.c.b16 %v346, %v338
    %v411 = vpack.c.b16 %v347, %v339
    %v412 = vpack.c.b16 %v348, %v340
    %v413 = vpack.c.b16 %v349, %v341
    %v414 = vpack.c.b16 %v350, %v342
    %v415 = vpack.c.b16 %v351, %v343
    %v416 = vpack.c.b16 %v352, %v344
    %481 = vmatprep.subr.bf16.mxu0 %v354
    %482 = vmatpush1.bf16.msra.mxu0 %v353
    %483 = vmatprep.subr.bf16.mxu0 %v362
    %484 = vmatpush1.bf16.msra.mxu0 %v361
    %485 = vmatprep.subr.bf16.mxu0 %v370
    %486 = vmatpush1.bf16.msra.mxu0 %v369
    %487 = vmatprep.subr.bf16.mxu0 %v378
    %488 = vmatpush1.bf16.msra.mxu0 %v377
    %489 = vmatprep.subr.bf16.mxu0 %v386
    %490 = vmatpush1.bf16.msra.mxu0 %v385
    %491 = vmatprep.subr.bf16.mxu0 %v394
    %492 = vmatpush1.bf16.msra.mxu0 %v393
    %493 = vmatprep.subr.bf16.mxu0 %v402
    %494 = vmatpush1.bf16.msra.mxu0 %v401
    %495 = vmatprep.subr.bf16.mxu0 %v410
    %496 = vmatpush1.bf16.msra.mxu0 %v409
    %497 = vmatprep.subr.bf16.mxu0 0
    %498 = vmatpush1.bf16.msra.mxu0 0
    %499 = vmatprep.subr.bf16.mxu0 0
    %500 = vmatpush1.bf16.msra.mxu0 0
    %501 = vmatprep.subr.bf16.mxu0 0
    %502 = vmatpush1.bf16.msra.mxu0 0
    %503 = vmatprep.subr.bf16.mxu0 0
    %504 = vmatpush1.bf16.msra.mxu0 0
    %505 = vmatprep.subr.bf16.mxu0 0
    %506 = vmatpush1.bf16.msra.mxu0 0
    %507 = vmatprep.subr.bf16.mxu0 0
    %508 = vmatpush1.bf16.msra.mxu0 0
    %509 = vmatprep.subr.bf16.mxu0 0
    %510 = vmatpush1.bf16.msra.mxu0 0
    %511 = vmatprep.subr.bf16.mxu0 0
    %512 = vmatpush1.bf16.msra.mxu0 0
    %513 = vmatprep.mubr.bf16.mxu0 0
    %514 = vmatmul.mubr.bf16.gmra.mrb[0].mxu0 %v54
    %v515 = vpop.f32.mrb[0].mxu0
    %v516 = vadd.f32 %v124, %v515
    %v517 = vpop.f32.mrb[0].mxu0
    %v518 = vadd.f32 %v128, %v517
    %v519 = vpop.f32.mrb[0].mxu0
    %v520 = vpop.f32.mrb[0].mxu0
    %521 = vdwg.mxu0
    %522 = vmatprep.subr.bf16.mxu0 %v356
    %523 = vmatpush1.bf16.msra.mxu0 %v355
    %524 = vmatprep.subr.bf16.mxu0 %v364
    %525 = vmatpush1.bf16.msra.mxu0 %v363
    %526 = vmatprep.subr.bf16.mxu0 %v372
    %527 = vmatpush1.bf16.msra.mxu0 %v371
    %528 = vmatprep.subr.bf16.mxu0 %v380
    %529 = vmatpush1.bf16.msra.mxu0 %v379
    %530 = vmatprep.subr.bf16.mxu0 %v388
    %531 = vmatpush1.bf16.msra.mxu0 %v387
    %532 = vmatprep.subr.bf16.mxu0 %v396
    %533 = vmatpush1.bf16.msra.mxu0 %v395
    %534 = vmatprep.subr.bf16.mxu0 %v404
    %535 = vmatpush1.bf16.msra.mxu0 %v403
    %536 = vmatprep.subr.bf16.mxu0 %v412
    %537 = vmatpush1.bf16.msra.mxu0 %v411
    %538 = vmatprep.subr.bf16.mxu0 0
    %539 = vmatpush1.bf16.msra.mxu0 0
    %540 = vmatprep.subr.bf16.mxu0 0
    %541 = vmatpush1.bf16.msra.mxu0 0
    %542 = vmatprep.subr.bf16.mxu0 0
    %543 = vmatpush1.bf16.msra.mxu0 0
    %544 = vmatprep.subr.bf16.mxu0 0
    %545 = vmatpush1.bf16.msra.mxu0 0
    %546 = vmatprep.subr.bf16.mxu0 0
    %547 = vmatpush1.bf16.msra.mxu0 0
    %548 = vmatprep.subr.bf16.mxu0 0
    %549 = vmatpush1.bf16.msra.mxu0 0
    %550 = vmatprep.subr.bf16.mxu0 0
    %551 = vmatpush1.bf16.msra.mxu0 0
    %552 = vmatprep.subr.bf16.mxu0 0
    %553 = vmatpush1.bf16.msra.mxu0 0
    %554 = vmatprep.mubr.bf16.mxu0 0
    %555 = vmatmul.mubr.bf16.gmra.mrb[0].mxu0 %v54
    %v556 = vpop.f32.mrb[0].mxu0
    %v557 = vadd.f32 %v132, %v556
    %v558 = vpop.f32.mrb[0].mxu0
    %v559 = vadd.f32 %v136, %v558
    %v560 = vpop.f32.mrb[0].mxu0
    %v561 = vpop.f32.mrb[0].mxu0
    %562 = vdwg.mxu0
    %563 = vmatprep.subr.bf16.mxu0 %v358
    %564 = vmatpush1.bf16.msra.mxu0 %v357
    %565 = vmatprep.subr.bf16.mxu0 %v366
    %566 = vmatpush1.bf16.msra.mxu0 %v365
    %567 = vmatprep.subr.bf16.mxu0 %v374
    %568 = vmatpush1.bf16.msra.mxu0 %v373
    %569 = vmatprep.subr.bf16.mxu0 %v382
    %570 = vmatpush1.bf16.msra.mxu0 %v381
    %571 = vmatprep.subr.bf16.mxu0 %v390
    %572 = vmatpush1.bf16.msra.mxu0 %v389
    %573 = vmatprep.subr.bf16.mxu0 %v398
    %574 = vmatpush1.bf16.msra.mxu0 %v397
    %575 = vmatprep.subr.bf16.mxu0 %v406
    %576 = vmatpush1.bf16.msra.mxu0 %v405
    %577 = vmatprep.subr.bf16.mxu0 %v414
    %578 = vmatpush1.bf16.msra.mxu0 %v413
    %579 = vmatprep.subr.bf16.mxu0 0
    %580 = vmatpush1.bf16.msra.mxu0 0
    %581 = vmatprep.subr.bf16.mxu0 0
    %582 = vmatpush1.bf16.msra.mxu0 0
    %583 = vmatprep.subr.bf16.mxu0 0
    %584 = vmatpush1.bf16.msra.mxu0 0
    %585 = vmatprep.subr.bf16.mxu0 0
    %586 = vmatpush1.bf16.msra.mxu0 0
    %587 = vmatprep.subr.bf16.mxu0 0
    %588 = vmatpush1.bf16.msra.mxu0 0
    %589 = vmatprep.subr.bf16.mxu0 0
    %590 = vmatpush1.bf16.msra.mxu0 0
    %591 = vmatprep.subr.bf16.mxu0 0
    %592 = vmatpush1.bf16.msra.mxu0 0
    %593 = vmatprep.subr.bf16.mxu0 0
    %594 = vmatpush1.bf16.msra.mxu0 0
    %595 = vmatprep.mubr.bf16.mxu0 0
    %596 = vmatmul.mubr.bf16.gmra.mrb[0].mxu0 %v54
    %v597 = vpop.f32.mrb[0].mxu0
    %v598 = vadd.f32 %v140, %v597
    %v599 = vpop.f32.mrb[0].mxu0
    %v600 = vadd.f32 %v144, %v599
    %v601 = vpop.f32.mrb[0].mxu0
    %v602 = vpop.f32.mrb[0].mxu0
    %603 = vdwg.mxu0
    %604 = vmatprep.subr.bf16.mxu0 %v360
    %605 = vmatpush1.bf16.msra.mxu0 %v359
    %606 = vmatprep.subr.bf16.mxu0 %v368
    %607 = vmatpush1.bf16.msra.mxu0 %v367
    %608 = vmatprep.subr.bf16.mxu0 %v376
    %609 = vmatpush1.bf16.msra.mxu0 %v375
    %610 = vmatprep.subr.bf16.mxu0 %v384
    %611 = vmatpush1.bf16.msra.mxu0 %v383
    %612 = vmatprep.subr.bf16.mxu0 %v392
    %613 = vmatpush1.bf16.msra.mxu0 %v391
    %614 = vmatprep.subr.bf16.mxu0 %v400
    %615 = vmatpush1.bf16.msra.mxu0 %v399
    %616 = vmatprep.subr.bf16.mxu0 %v408
    %617 = vmatpush1.bf16.msra.mxu0 %v407
    %618 = vmatprep.subr.bf16.mxu0 %v416
    %619 = vmatpush1.bf16.msra.mxu0 %v415
    %620 = vmatprep.subr.bf16.mxu0 0
    %621 = vmatpush1.bf16.msra.mxu0 0
    %622 = vmatprep.subr.bf16.mxu0 0
    %623 = vmatpush1.bf16.msra.mxu0 0
    %624 = vmatprep.subr.bf16.mxu0 0
    %625 = vmatpush1.bf16.msra.mxu0 0
    %626 = vmatprep.subr.bf16.mxu0 0
    %627 = vmatpush1.bf16.msra.mxu0 0
    %628 = vmatprep.subr.bf16.mxu0 0
    %629 = vmatpush1.bf16.msra.mxu0 0
    %630 = vmatprep.subr.bf16.mxu0 0
    %631 = vmatpush1.bf16.msra.mxu0 0
    %632 = vmatprep.subr.bf16.mxu0 0
    %633 = vmatpush1.bf16.msra.mxu0 0
    %634 = vmatprep.subr.bf16.mxu0 0
    %635 = vmatpush1.bf16.msra.mxu0 0
    %636 = vmatprep.mubr.bf16.mxu0 0
    %637 = vmatmul.mubr.bf16.gmra.mrb[0].mxu0 %v54
    %v638 = vpop.f32.mrb[0].mxu0
    %v639 = vadd.f32 %v148, %v638
    %v640 = vpop.f32.mrb[0].mxu0
    %v641 = vadd.f32 %v152, %v640
    %v642 = vpop.f32.mrb[0].mxu0
    %v643 = vpop.f32.mrb[0].mxu0
    %644 = vdwg.mxu0
    %v645 = vlaneseq
    %v646 = vshrl.u32 %v645, 7
    %v647 = vadd.s32 %v646, 8
    %v648 = vadd.s32 %v646, 16
    %v649 = vadd.s32 %v646, 24
    %v650 = vadd.s32 %v646, 32
    %v651 = vadd.s32 %v646, 40
    %v652 = vadd.s32 %v646, 48
    %v653 = vadd.s32 %v646, 56
    %v654 = vadd.s32 %v646, 64
    %v655 = vadd.s32 %v646, 72
    %v656 = vadd.s32 %v646, 80
    %v657 = vadd.s32 %v646, 88
    %v658 = vadd.s32 %v646, 96
    %v659 = vadd.s32 %v646, 104
    %v660 = vadd.s32 %v646, 112
    %v661 = vadd.s32 %v646, 120
    %v662 = vlaneseq
    %v663 = vand.u32 %v662, 127
    %vm664 = vcmp.lt.s32.totalorder %v646, 0
    %v665 = vsub.s32 0, %v646
    %v666 = vsel %vm664, %v665, %v646
    %v667 = vshrl.u32 %v666, 5
    %v668 = vand.u32 %v666, 31
    %v669 = vsub.s32 0, %v668
    %v670 = vsel %vm664, %v669, %v668
    %vm671 = vcmp.lt.s32.totalorder %v647, 0
    %v672 = vsub.s32 0, %v647
    %v673 = vsel %vm671, %v672, %v647
    %v674 = vshrl.u32 %v673, 5
    %v675 = vand.u32 %v673, 31
    %v676 = vsub.s32 0, %v675
    %v677 = vsel %vm671, %v676, %v675
    %vm678 = vcmp.lt.s32.totalorder %v648, 0
    %v679 = vsub.s32 0, %v648
    %v680 = vsel %vm678, %v679, %v648
    %v681 = vshrl.u32 %v680, 5
    %v682 = vand.u32 %v680, 31
    %v683 = vsub.s32 0, %v682
    %v684 = vsel %vm678, %v683, %v682
    %vm685 = vcmp.lt.s32.totalorder %v649, 0
    %v686 = vsub.s32 0, %v649
    %v687 = vsel %vm685, %v686, %v649
    %v688 = vshrl.u32 %v687, 5
    %v689 = vand.u32 %v687, 31
    %v690 = vsub.s32 0, %v689
    %v691 = vsel %vm685, %v690, %v689
    %vm692 = vcmp.lt.s32.totalorder %v650, 0
    %v693 = vsub.s32 0, %v650
    %v694 = vsel %vm692, %v693, %v650
    %v695 = vshrl.u32 %v694, 5
    %v696 = vand.u32 %v694, 31
    %v697 = vsub.s32 0, %v696
    %v698 = vsel %vm692, %v697, %v696
    %vm699 = vcmp.lt.s32.totalorder %v651, 0
    %v700 = vsub.s32 0, %v651
    %v701 = vsel %vm699, %v700, %v651
    %v702 = vshrl.u32 %v701, 5
    %v703 = vand.u32 %v701, 31
    %v704 = vsub.s32 0, %v703
    %v705 = vsel %vm699, %v704, %v703
    %vm706 = vcmp.lt.s32.totalorder %v652, 0
    %v707 = vsub.s32 0, %v652
    %v708 = vsel %vm706, %v707, %v652
    %v709 = vshrl.u32 %v708, 5
    %v710 = vand.u32 %v708, 31
    %v711 = vsub.s32 0, %v710
    %v712 = vsel %vm706, %v711, %v710
    %vm713 = vcmp.lt.s32.totalorder %v653, 0
    %v714 = vsub.s32 0, %v653
    %v715 = vsel %vm713, %v714, %v653
    %v716 = vshrl.u32 %v715, 5
    %v717 = vand.u32 %v715, 31
    %v718 = vsub.s32 0, %v717
    %v719 = vsel %vm713, %v718, %v717
    %vm720 = vcmp.lt.s32.totalorder %v654, 0
    %v721 = vsub.s32 0, %v654
    %v722 = vsel %vm720, %v721, %v654
    %v723 = vshrl.u32 %v722, 5
    %v724 = vand.u32 %v722, 31
    %v725 = vsub.s32 0, %v724
    %v726 = vsel %vm720, %v725, %v724
    %vm727 = vcmp.lt.s32.totalorder %v655, 0
    %v728 = vsub.s32 0, %v655
    %v729 = vsel %vm727, %v728, %v655
    %v730 = vshrl.u32 %v729, 5
    %v731 = vand.u32 %v729, 31
    %v732 = vsub.s32 0, %v731
    %v733 = vsel %vm727, %v732, %v731
    %vm734 = vcmp.lt.s32.totalorder %v656, 0
    %v735 = vsub.s32 0, %v656
    %v736 = vsel %vm734, %v735, %v656
    %v737 = vshrl.u32 %v736, 5
    %v738 = vand.u32 %v736, 31
    %v739 = vsub.s32 0, %v738
    %v740 = vsel %vm734, %v739, %v738
    %vm741 = vcmp.lt.s32.totalorder %v657, 0
    %v742 = vsub.s32 0, %v657
    %v743 = vsel %vm741, %v742, %v657
    %v744 = vshrl.u32 %v743, 5
    %v745 = vand.u32 %v743, 31
    %v746 = vsub.s32 0, %v745
    %v747 = vsel %vm741, %v746, %v745
    %vm748 = vcmp.lt.s32.totalorder %v658, 0
    %v749 = vsub.s32 0, %v658
    %v750 = vsel %vm748, %v749, %v658
    %v751 = vshrl.u32 %v750, 5
    %v752 = vand.u32 %v750, 31
    %v753 = vsub.s32 0, %v752
    %v754 = vsel %vm748, %v753, %v752
    %vm755 = vcmp.lt.s32.totalorder %v659, 0
    %v756 = vsub.s32 0, %v659
    %v757 = vsel %vm755, %v756, %v659
    %v758 = vshrl.u32 %v757, 5
    %v759 = vand.u32 %v757, 31
    %v760 = vsub.s32 0, %v759
    %v761 = vsel %vm755, %v760, %v759
    %vm762 = vcmp.lt.s32.totalorder %v660, 0
    %v763 = vsub.s32 0, %v660
    %v764 = vsel %vm762, %v763, %v660
    %v765 = vshrl.u32 %v764, 5
    %v766 = vand.u32 %v764, 31
    %v767 = vsub.s32 0, %v766
    %v768 = vsel %vm762, %v767, %v766
    %vm769 = vcmp.lt.s32.totalorder %v661, 0
    %v770 = vsub.s32 0, %v661
    %v771 = vsel %vm769, %v770, %v661
    %v772 = vshrl.u32 %v771, 5
    %v773 = vand.u32 %v771, 31
    %v774 = vsub.s32 0, %v773
    %v775 = vsel %vm769, %v774, %v773
    %vm776 = vcmp.ne.s32.totalorder %v670, 0
    %vm777 = vcmp.ne.s32.totalorder %v677, 0
    %vm778 = vcmp.ne.s32.totalorder %v684, 0
    %vm779 = vcmp.ne.s32.totalorder %v691, 0
    %vm780 = vcmp.ne.s32.totalorder %v698, 0
    %vm781 = vcmp.ne.s32.totalorder %v705, 0
    %vm782 = vcmp.ne.s32.totalorder %v712, 0
    %vm783 = vcmp.ne.s32.totalorder %v719, 0
    %vm784 = vcmp.ne.s32.totalorder %v726, 0
    %vm785 = vcmp.ne.s32.totalorder %v733, 0
    %vm786 = vcmp.ne.s32.totalorder %v740, 0
    %vm787 = vcmp.ne.s32.totalorder %v747, 0
    %vm788 = vcmp.ne.s32.totalorder %v754, 0
    %vm789 = vcmp.ne.s32.totalorder %v761, 0
    %vm790 = vcmp.ne.s32.totalorder %v768, 0
    %vm791 = vcmp.ne.s32.totalorder %v775, 0
    %vm792 = vcmp.lt.s32.totalorder %v670, 0
    %vm793 = vcmp.lt.s32.totalorder %v677, 0
    %vm794 = vcmp.lt.s32.totalorder %v684, 0
    %vm795 = vcmp.lt.s32.totalorder %v691, 0
    %vm796 = vcmp.lt.s32.totalorder %v698, 0
    %vm797 = vcmp.lt.s32.totalorder %v705, 0
    %vm798 = vcmp.lt.s32.totalorder %v712, 0
    %vm799 = vcmp.lt.s32.totalorder %v719, 0
    %vm800 = vcmp.lt.s32.totalorder %v726, 0
    %vm801 = vcmp.lt.s32.totalorder %v733, 0
    %vm802 = vcmp.lt.s32.totalorder %v740, 0
    %vm803 = vcmp.lt.s32.totalorder %v747, 0
    %vm804 = vcmp.lt.s32.totalorder %v754, 0
    %vm805 = vcmp.lt.s32.totalorder %v761, 0
    %vm806 = vcmp.lt.s32.totalorder %v768, 0
    %vm807 = vcmp.lt.s32.totalorder %v775, 0
    %vm808 = vmand %vm792, %vm776
    %vm809 = vmand %vm793, %vm777
    %vm810 = vmand %vm794, %vm778
    %vm811 = vmand %vm795, %vm779
    %vm812 = vmand %vm796, %vm780
    %vm813 = vmand %vm797, %vm781
    %vm814 = vmand %vm798, %vm782
    %vm815 = vmand %vm799, %vm783
    %vm816 = vmand %vm800, %vm784
    %vm817 = vmand %vm801, %vm785
    %vm818 = vmand %vm802, %vm786
    %vm819 = vmand %vm803, %vm787
    %vm820 = vmand %vm804, %vm788
    %vm821 = vmand %vm805, %vm789
    %vm822 = vmand %vm806, %vm790
    %vm823 = vmand %vm807, %vm791
    %v824 = vadd.s32 %v670, 32
    %v825 = vadd.s32 %v677, 32
    %v826 = vadd.s32 %v684, 32
    %v827 = vadd.s32 %v691, 32
    %v828 = vadd.s32 %v698, 32
    %v829 = vadd.s32 %v705, 32
    %v830 = vadd.s32 %v712, 32
    %v831 = vadd.s32 %v719, 32
    %v832 = vadd.s32 %v726, 32
    %v833 = vadd.s32 %v733, 32
    %v834 = vadd.s32 %v740, 32
    %v835 = vadd.s32 %v747, 32
    %v836 = vadd.s32 %v754, 32
    %v837 = vadd.s32 %v761, 32
    %v838 = vadd.s32 %v768, 32
    %v839 = vadd.s32 %v775, 32
    %v840 = vsel %vm808, %v824, %v670
    %v841 = vsel %vm809, %v825, %v677
    %v842 = vsel %vm810, %v826, %v684
    %v843 = vsel %vm811, %v827, %v691
    %v844 = vsel %vm812, %v828, %v698
    %v845 = vsel %vm813, %v829, %v705
    %v846 = vsel %vm814, %v830, %v712
    %v847 = vsel %vm815, %v831, %v719
    %v848 = vsel %vm816, %v832, %v726
    %v849 = vsel %vm817, %v833, %v733
    %v850 = vsel %vm818, %v834, %v740
    %v851 = vsel %vm819, %v835, %v747
    %v852 = vsel %vm820, %v836, %v754
    %v853 = vsel %vm821, %v837, %v761
    %v854 = vsel %vm822, %v838, %v768
    %v855 = vsel %vm823, %v839, %v775
    %vm856 = vcmp.eq.s32.totalorder %v840, %v663
    %vm857 = vcmp.eq.s32.totalorder %v841, %v663
    %vm858 = vcmp.eq.s32.totalorder %v842, %v663
    %vm859 = vcmp.eq.s32.totalorder %v843, %v663
    %vm860 = vcmp.eq.s32.totalorder %v844, %v663
    %vm861 = vcmp.eq.s32.totalorder %v845, %v663
    %vm862 = vcmp.eq.s32.totalorder %v846, %v663
    %vm863 = vcmp.eq.s32.totalorder %v847, %v663
    %vm864 = vcmp.eq.s32.totalorder %v848, %v663
    %vm865 = vcmp.eq.s32.totalorder %v849, %v663
    %vm866 = vcmp.eq.s32.totalorder %v850, %v663
    %vm867 = vcmp.eq.s32.totalorder %v851, %v663
    %vm868 = vcmp.eq.s32.totalorder %v852, %v663
    %vm869 = vcmp.eq.s32.totalorder %v853, %v663
    %vm870 = vcmp.eq.s32.totalorder %v854, %v663
    %vm871 = vcmp.eq.s32.totalorder %v855, %v663
    %v872 = vsel %vm856, 1.0, 0.0
    %v873 = vsel %vm857, 1.0, 0.0
    %v874 = vsel %vm858, 1.0, 0.0
    %v875 = vsel %vm859, 1.0, 0.0
    %v876 = vsel %vm860, 1.0, 0.0
    %v877 = vsel %vm861, 1.0, 0.0
    %v878 = vsel %vm862, 1.0, 0.0
    %v879 = vsel %vm863, 1.0, 0.0
    %v880 = vsel %vm864, 1.0, 0.0
    %v881 = vsel %vm865, 1.0, 0.0
    %v882 = vsel %vm866, 1.0, 0.0
    %v883 = vsel %vm867, 1.0, 0.0
    %v884 = vsel %vm868, 1.0, 0.0
    %v885 = vsel %vm869, 1.0, 0.0
    %v886 = vsel %vm870, 1.0, 0.0
    %v887 = vsel %vm871, 1.0, 0.0
    %v888 = vpack.c.bf16 %v873, %v872
    %v889 = vpack.c.bf16 %v875, %v874
    %v890 = vpack.c.bf16 %v877, %v876
    %v891 = vpack.c.bf16 %v879, %v878
    %v892 = vpack.c.bf16 %v881, %v880
    %v893 = vpack.c.bf16 %v883, %v882
    %v894 = vpack.c.bf16 %v885, %v884
    %v895 = vpack.c.bf16 %v887, %v886
    %v896 = vmul.f32 %v516, %v598
    %v897 = vmul.f32 %v518, %v600
    %v898 = vmul.f32 %v557, %v639
    %v899 = vmul.f32 %v559, %v641
    %v900 = vadd.f32 %v896, %v897
    %v901 = vadd.f32 %v900, %v898
    %v902 = vadd.f32 %v901, %v899
    %v903 = vpack.c.bf16 %v902, %v902
    %904 = vmatprep.subr.bf16.mxu0 0
    %905 = vmatpush1.bf16.msra.mxu0 %v888
    %906 = vmatprep.subr.bf16.mxu0 0
    %907 = vmatpush1.bf16.msra.mxu0 %v889
    %908 = vmatprep.subr.bf16.mxu0 0
    %909 = vmatpush1.bf16.msra.mxu0 %v890
    %910 = vmatprep.subr.bf16.mxu0 0
    %911 = vmatpush1.bf16.msra.mxu0 %v891
    %912 = vmatprep.subr.bf16.mxu0 0
    %913 = vmatpush1.bf16.msra.mxu0 %v892
    %914 = vmatprep.subr.bf16.mxu0 0
    %915 = vmatpush1.bf16.msra.mxu0 %v893
    %916 = vmatprep.subr.bf16.mxu0 0
    %917 = vmatpush1.bf16.msra.mxu0 %v894
    %918 = vmatprep.subr.bf16.mxu0 0
    %919 = vmatpush1.bf16.msra.mxu0 %v895
    %920 = vmatprep.subr.bf16.mxu0 0
    %921 = vmatpush1.bf16.msra.mxu0 0
    %922 = vmatprep.subr.bf16.mxu0 0
    %923 = vmatpush1.bf16.msra.mxu0 0
    %924 = vmatprep.subr.bf16.mxu0 0
    %925 = vmatpush1.bf16.msra.mxu0 0
    %926 = vmatprep.subr.bf16.mxu0 0
    %927 = vmatpush1.bf16.msra.mxu0 0
    %928 = vmatprep.subr.bf16.mxu0 0
    %929 = vmatpush1.bf16.msra.mxu0 0
    %930 = vmatprep.subr.bf16.mxu0 0
    %931 = vmatpush1.bf16.msra.mxu0 0
    %932 = vmatprep.subr.bf16.mxu0 0
    %933 = vmatpush1.bf16.msra.mxu0 0
    %934 = vmatprep.subr.bf16.mxu0 0
    %935 = vmatpush1.bf16.msra.mxu0 0
    %936 = vmatprep.mubr.bf16.mxu0 0
    %937 = vmatmul.mubr.bf16.gmra.mrb[0].mxu0 %v903
    %v938 = vpop.f32.mrb[0].mxu0
    %v939 = vadd.f32 0.0, %v938
    %v940 = vpop.f32.mrb[0].mxu0
    %v941 = vpop.f32.mrb[0].mxu0
    %v942 = vpop.f32.mrb[0].mxu0
    %943 = vdwg.mxu0
    %v944 = vmul.f32 %v516, %v516
    %v945 = vmul.f32 %v518, %v518
    %v946 = vmul.f32 %v557, %v557
    %v947 = vmul.f32 %v559, %v559
    %v948 = vadd.f32 %v944, %v945
    %v949 = vadd.f32 %v948, %v946
    %v950 = vadd.f32 %v949, %v947
    %v951 = vpack.c.bf16 %v950, %v950
    %952 = vmatprep.subr.bf16.mxu0 0
    %953 = vmatpush1.bf16.msra.mxu0 %v888
    %954 = vmatprep.subr.bf16.mxu0 0
    %955 = vmatpush1.bf16.msra.mxu0 %v889
    %956 = vmatprep.subr.bf16.mxu0 0
    %957 = vmatpush1.bf16.msra.mxu0 %v890
    %958 = vmatprep.subr.bf16.mxu0 0
    %959 = vmatpush1.bf16.msra.mxu0 %v891
    %960 = vmatprep.subr.bf16.mxu0 0
    %961 = vmatpush1.bf16.msra.mxu0 %v892
    %962 = vmatprep.subr.bf16.mxu0 0
    %963 = vmatpush1.bf16.msra.mxu0 %v893
    %964 = vmatprep.subr.bf16.mxu0 0
    %965 = vmatpush1.bf16.msra.mxu0 %v894
    %966 = vmatprep.subr.bf16.mxu0 0
    %967 = vmatpush1.bf16.msra.mxu0 %v895
    %968 = vmatprep.subr.bf16.mxu0 0
    %969 = vmatpush1.bf16.msra.mxu0 0
    %970 = vmatprep.subr.bf16.mxu0 0
    %971 = vmatpush1.bf16.msra.mxu0 0
    %972 = vmatprep.subr.bf16.mxu0 0
    %973 = vmatpush1.bf16.msra.mxu0 0
    %974 = vmatprep.subr.bf16.mxu0 0
    %975 = vmatpush1.bf16.msra.mxu0 0
    %976 = vmatprep.subr.bf16.mxu0 0
    %977 = vmatpush1.bf16.msra.mxu0 0
    %978 = vmatprep.subr.bf16.mxu0 0
    %979 = vmatpush1.bf16.msra.mxu0 0
    %980 = vmatprep.subr.bf16.mxu0 0
    %981 = vmatpush1.bf16.msra.mxu0 0
    %982 = vmatprep.subr.bf16.mxu0 0
    %983 = vmatpush1.bf16.msra.mxu0 0
    %984 = vmatprep.mubr.bf16.mxu0 0
    %985 = vmatmul.mubr.bf16.gmra.mrb[0].mxu0 %v951
    %v986 = vpop.f32.mrb[0].mxu0
    %v987 = vadd.f32 0.0, %v986
    %v988 = vpop.f32.mrb[0].mxu0
    %v989 = vpop.f32.mrb[0].mxu0
    %v990 = vpop.f32.mrb[0].mxu0
    %991 = vdwg.mxu0
    %v992 = vmul.f32 %v598, %v598
    %v993 = vmul.f32 %v600, %v600
    %v994 = vmul.f32 %v639, %v639
    %v995 = vmul.f32 %v641, %v641
    %v996 = vadd.f32 %v992, %v993
    %v997 = vadd.f32 %v996, %v994
    %v998 = vadd.f32 %v997, %v995
    %v999 = vpack.c.bf16 %v998, %v998
    %1000 = vmatprep.subr.bf16.mxu0 0
    %1001 = vmatpush1.bf16.msra.mxu0 %v888
    %1002 = vmatprep.subr.bf16.mxu0 0
    %1003 = vmatpush1.bf16.msra.mxu0 %v889
    %1004 = vmatprep.subr.bf16.mxu0 0
    %1005 = vmatpush1.bf16.msra.mxu0 %v890
    %1006 = vmatprep.subr.bf16.mxu0 0
    %1007 = vmatpush1.bf16.msra.mxu0 %v891
    %1008 = vmatprep.subr.bf16.mxu0 0
    %1009 = vmatpush1.bf16.msra.mxu0 %v892
    %1010 = vmatprep.subr.bf16.mxu0 0
    %1011 = vmatpush1.bf16.msra.mxu0 %v893
    %1012 = vmatprep.subr.bf16.mxu0 0
    %1013 = vmatpush1.bf16.msra.mxu0 %v894
    %1014 = vmatprep.subr.bf16.mxu0 0
    %1015 = vmatpush1.bf16.msra.mxu0 %v895
    %1016 = vmatprep.subr.bf16.mxu0 0
    %1017 = vmatpush1.bf16.msra.mxu0 0
    %1018 = vmatprep.subr.bf16.mxu0 0
    %1019 = vmatpush1.bf16.msra.mxu0 0
    %1020 = vmatprep.subr.bf16.mxu0 0
    %1021 = vmatpush1.bf16.msra.mxu0 0
    %1022 = vmatprep.subr.bf16.mxu0 0
    %1023 = vmatpush1.bf16.msra.mxu0 0
    %1024 = vmatprep.subr.bf16.mxu0 0
    %1025 = vmatpush1.bf16.msra.mxu0 0
    %1026 = vmatprep.subr.bf16.mxu0 0
    %1027 = vmatpush1.bf16.msra.mxu0 0
    %1028 = vmatprep.subr.bf16.mxu0 0
    %1029 = vmatpush1.bf16.msra.mxu0 0
    %1030 = vmatprep.subr.bf16.mxu0 0
    %1031 = vmatpush1.bf16.msra.mxu0 0
    %1032 = vmatprep.mubr.bf16.mxu0 0
    %1033 = vmatmul.mubr.bf16.gmra.mrb[0].mxu0 %v999
    %v1034 = vpop.f32.mrb[0].mxu0
    %v1035 = vadd.f32 0.0, %v1034
    %v1036 = vpop.f32.mrb[0].mxu0
    %v1037 = vpop.f32.mrb[0].mxu0
    %v1038 = vpop.f32.mrb[0].mxu0
    %1039 = vdwg.mxu0
    %v1040 = vmax.f32 %v987, 1e-16
    %v1041 = vmax.f32 %v1035, 1e-16
    %v1042 = vmul.f32 %v1040, %v1041
    %v1043 = vrsqrt.pop %v1042
    %v1044 = vmul.f32 %v939, %v1043
    %vm1045 = vcmask 261120
    %1046 = vst.msk [vmem:[#allocation8] sm:$0xff] %vm1045, %v1044
    // Predicated region
    $region26: #{tpu_custom_call.1} parent=1 // pred_check
      _
    $region27: #{tpu_custom_call.1} parent=1 // pred_check_branch
      %1048 = sbr.rel (0) target = $region29
    $region28: #{tpu_custom_call.1} parent=1 // pred_region
      %s1050 = ssub.s32 128, 128
      %1051 = vsyncadd [#allocation4], %s1050
      %s1053 = sshll.u32 [#allocation8], 4
      %s1054 = int_to_ptr.vmem [resolvable:$true] %s1053
      %1056 = dma.vmem_to_hbm [thread:$0]  %s1054, 128, %s3, [#allocation4]
    $region29: #{tpu_custom_call.1} parent=1 // pred_fallthru
      _
    // Predicated region
    $region30: #{tpu_custom_call.1} parent=1 // pred_check
      _
    $region31: #{tpu_custom_call.1} parent=1 // pred_check_branch
      %1058 = sbr.rel (0) target = $region33
    $region32: #{tpu_custom_call.1} parent=1 // pred_region
      %1059 = dma.done [#allocation4], 128
    $region33: #{tpu_custom_call.1} parent=1 // pred_fallthru
      _
    %1060 = vsyncpa [#allocation3], 1
    %1061 = vsyncpa [#allocation6], 1
    %1062 = vsyncpa [#allocation4], 1

</llo_original>
